<compile_context>
chip_gen: v5e
topology: v5e:2x2
jax: 0.10.0
libtpu: 0.0.40
codegen_flags: <defaults>
</compile_context>

<pallas_src>
import jax
import jax.numpy as jnp
from jax.experimental import pallas as pl
from jax.experimental.pallas import tpu as pltpu

LANE = 128
MAX_TILE_B = 65536  # ~13 MiB VMEM/tile (f32, double-buffered) -> safe on v5e/v6e/v7x


def _round_up(n: int, m: int) -> int:
    return -(-n // m) * m


def _choose_tile_b(batch: int) -> int:
    """Batch tile (multiple of 128).

    Small B -> one small tile (launch overhead dominates anyway).
    Medium/large B -> split into >=2 tiles (both v7x TCs get work), capped at
    MAX_TILE_B so double-buffered VMEM stays well under v7x's 64 MiB.
    """
    b_al = _round_up(batch, LANE)
    if b_al <= 8 * LANE:
        return b_al
    half = _round_up((b_al + 1) // 2, LANE)
    return min(MAX_TILE_B, half)


def mlp_kernel(x_ref, w1_ref, b1_ref, w2_ref, b2_ref, o_ref):
    # x_ref : (5, TILE_B)   feature-major, batch on lanes
    # w1_ref: (10, 5)       PyTorch (out, in) layout
    # b1_ref: (10, 1)
    # w2_ref: (10, 1)       fc2 weight as a column
    # b2_ref: (1, 1)
    # o_ref : (1, TILE_B)   lane-dense output tile
    x = x_ref[...]

    # fc1 + ReLU: (10,5) @ (5,TILE_B) -> (10, TILE_B); output lanes fully dense.
    h = jnp.dot(w1_ref[...], x, preferred_element_type=jnp.float32) + b1_ref[...]
    h = jnp.maximum(h, 0.0)

    # fc2 on the VPU: broadcast-multiply + sublane reduce over the 10 hidden
    # units (avoids an N=1/K=10, >99%-padded MXU matmul).
    y = jnp.sum(h * w2_ref[...], axis=0, keepdims=True) + b2_ref[...]  # (1, TILE_B)

    o_ref[...] = y.astype(o_ref.dtype)


@jax.jit
def gasto_predictor(x, w1, b1, w2, b2):
    """Forward pass of GastoPredictor.

    x : (B, 5) float32
    w1: (10, 5), b1: (10,), w2: (1, 10), b2: (1,)   (PyTorch nn.Linear layout)
    returns (B, 1) float32
    """
    B, in_f = x.shape
    hid = w1.shape[0]

    tile_b = _choose_tile_b(B)
    n_tiles = pl.cdiv(B, tile_b)
    b_pad = n_tiles * tile_b

    # Fused transpose + pad + cast in a single XLA pass; only the tail columns
    # of the last tile are padded (zero columns produce discarded outputs).
    x_t = jnp.pad(x.T.astype(jnp.float32), ((0, 0), (0, b_pad - B)))

    w1_c = w1.astype(jnp.float32)                      # (10, 5)
    b1_c = b1.reshape(hid, 1).astype(jnp.float32)      # (10, 1)
    w2_c = w2.reshape(hid, 1).astype(jnp.float32)      # (10, 1) column
    b2_c = b2.reshape(1, 1).astype(jnp.float32)        # (1, 1)

    # Honest VMEM accounting: (8,128)-tiled buffers -> x (5->8 sublanes) and
    # out (1->8 sublanes) double-buffered plus the (10->16 sublane) f32 h temp
    # come to ~200-256 B per batch element; add headroom and round up.
    vmem_limit = max(32 << 20, _round_up(256 * tile_b + (2 << 20), 1 << 20))

    out = pl.pallas_call(
        mlp_kernel,
        out_shape=jax.ShapeDtypeStruct((1, b_pad), jnp.float32),
        grid=(n_tiles,),
        in_specs=[
            pl.BlockSpec((in_f, tile_b), lambda i: (0, i)),  # x: streamed per tile
            pl.BlockSpec((hid, in_f), lambda i: (0, 0)),     # weights: VMEM-resident
            pl.BlockSpec((hid, 1), lambda i: (0, 0)),
            pl.BlockSpec((hid, 1), lambda i: (0, 0)),
            pl.BlockSpec((1, 1), lambda i: (0, 0)),
        ],
        out_specs=pl.BlockSpec((1, tile_b), lambda i: (0, i)),
        compiler_params=pltpu.CompilerParams(
            dimension_semantics=("parallel",),
            vmem_limit_bytes=vmem_limit,
        ),
    )(x_t, w1_c, b1_c, w2_c, b2_c)

    return out[0, :B].reshape(B, 1)


def reference(x, w1, b1, w2, b2):
    h = jnp.maximum(x @ w1.T + b1, 0.0)
    return h @ w2.T + b2


if __name__ == "__main__":
    key = jax.random.PRNGKey(0)
    kx, k1, k2, k3, k4, kx2 = jax.random.split(key, 6)

    B, IN, HID = 8, 5, 10
    x = jax.random.normal(kx, (B, IN), jnp.float32)
    # Deterministic synthetic parameters in PyTorch nn.Linear layout.
    w1 = jax.random.uniform(k1, (HID, IN), jnp.float32, -0.4, 0.4)
    b1 = jax.random.uniform(k2, (HID,), jnp.float32, -0.4, 0.4)
    w2 = jax.random.uniform(k3, (1, HID), jnp.float32, -0.3, 0.3)
    b2 = jax.random.uniform(k4, (1,), jnp.float32, -0.3, 0.3)

    out = jax.block_until_ready(gasto_predictor(x, w1, b1, w2, b2))
    ref = reference(x, w1, b1, w2, b2)
    assert out.shape == (B, 1)
    assert jnp.allclose(out, ref, atol=1e-5, rtol=1e-5)

    # Multi-tile / ragged-batch check (exercises the >=2-tile grid + padding path).
    B2 = 2304
    x2 = jax.random.normal(kx2, (B2, IN), jnp.float32)
    out2 = jax.block_until_ready(gasto_predictor(x2, w1, b1, w2, b2))
    ref2 = reference(x2, w1, b1, w2, b2)
    assert out2.shape == (B2, 1)
    assert jnp.allclose(out2, ref2, atol=1e-5, rtol=1e-5)

    print("KERNEL_OK")
</pallas_src>

<mosaic_0001>
module attributes {stable_mosaic.version = 11 : i64} {
  func.func @mlp_kernel(%arg0: i32, %arg1: memref<5x128xf32, #tpu.memory_space<vmem>>, %arg2: memref<10x5xf32, #tpu.memory_space<vmem>>, %arg3: memref<10x1xf32, #tpu.memory_space<vmem>>, %arg4: memref<10x1xf32, #tpu.memory_space<vmem>>, %arg5: memref<1x1xf32, #tpu.memory_space<vmem>>, %arg6: memref<1x128xf32, #tpu.memory_space<vmem>>) attributes {dimension_semantics = [#tpu.dimension_semantics<parallel>], iteration_bounds = array<i64: 1>, scalar_prefetch = 0 : i64, scratch_operands = 0 : i64, tpu.core_type = #tpu.core_type<tc>, window_params = [{transform_indices = @transform_0, window_bounds = array<i64: 5, 128>}, {pipeline_mode = #tpu.pipeline_mode<synchronous>, transform_indices = @transform_1, window_bounds = array<i64: 10, 5>}, {pipeline_mode = #tpu.pipeline_mode<synchronous>, transform_indices = @transform_2, window_bounds = array<i64: 10, 1>}, {pipeline_mode = #tpu.pipeline_mode<synchronous>, transform_indices = @transform_3, window_bounds = array<i64: 10, 1>}, {pipeline_mode = #tpu.pipeline_mode<synchronous>, transform_indices = @transform_4, window_bounds = array<i64: 1, 1>}, {transform_indices = @transform_5, window_bounds = array<i64: 1, 128>}]} {
    %c0 = arith.constant 0 : index
    %c0_0 = arith.constant 0 : index
    %0 = vector.load %arg1[%c0, %c0_0] : memref<5x128xf32, #tpu.memory_space<vmem>>, vector<5x128xf32>
    %c0_1 = arith.constant 0 : index
    %c0_2 = arith.constant 0 : index
    %1 = vector.load %arg2[%c0_1, %c0_2] : memref<10x5xf32, #tpu.memory_space<vmem>>, vector<10x5xf32>
    %cst = arith.constant dense<0.000000e+00> : vector<10x128xf32>
    %2 = tpu.matmul %1, %0, %cst {dimension_numbers = #tpu.dot_dimension_numbers<[1], [0], [0], [1], [0, 0, 1, 1], [], []>} : vector<10x5xf32>, vector<5x128xf32>, vector<10x128xf32> -> vector<10x128xf32>
    %c0_3 = arith.constant 0 : index
    %c0_4 = arith.constant 0 : index
    %3 = vector.load %arg3[%c0_3, %c0_4] : memref<10x1xf32, #tpu.memory_space<vmem>>, vector<10x1xf32>
    %4 = vector.broadcast %3 : vector<10x1xf32> to vector<10x128xf32>
    %5 = arith.addf %2, %4 : vector<10x128xf32>
    %cst_5 = arith.constant 0.000000e+00 : f32
    %6 = vector.broadcast %cst_5 : f32 to vector<10x128xf32>
    %7 = arith.maximumf %5, %6 : vector<10x128xf32>
    %c0_6 = arith.constant 0 : index
    %c0_7 = arith.constant 0 : index
    %8 = vector.load %arg4[%c0_6, %c0_7] : memref<10x1xf32, #tpu.memory_space<vmem>>, vector<10x1xf32>
    %9 = vector.broadcast %8 : vector<10x1xf32> to vector<10x128xf32>
    %10 = arith.mulf %7, %9 : vector<10x128xf32>
    %cst_8 = arith.constant dense<0.000000e+00> : vector<128xf32>
    %11 = vector.multi_reduction <add>, %10, %cst_8 [0] : vector<10x128xf32> to vector<128xf32>
    %12 = vector.shape_cast %11 : vector<128xf32> to vector<1x128xf32>
    %c0_9 = arith.constant 0 : index
    %c0_10 = arith.constant 0 : index
    %13 = vector.load %arg5[%c0_9, %c0_10] : memref<1x1xf32, #tpu.memory_space<vmem>>, vector<1x1xf32>
    %14 = vector.broadcast %13 : vector<1x1xf32> to vector<1x128xf32>
    %15 = arith.addf %12, %14 : vector<1x128xf32>
    %c0_11 = arith.constant 0 : index
    %c0_12 = arith.constant 0 : index
    %16 = vector.load %arg6[%c0_11, %c0_12] : memref<1x128xf32, #tpu.memory_space<vmem>>, vector<1x128xf32>
    tpu.vector_store %arg6[%c0_11, %c0_12], %15 {strides = array<i32>} : memref<1x128xf32, #tpu.memory_space<vmem>>, vector<1x128xf32>,
    return
  }
  func.func @transform_0(%arg0: i32) -> (i32, i32) {
    %c0_i32 = arith.constant 0 : i32
    %c0_i32_0 = arith.constant 0 : i32
    return %c0_i32, %arg0 : i32, i32
  }
  func.func @transform_1(%arg0: i32) -> (i32, i32) {
    %c0_i32 = arith.constant 0 : i32
    %c0_i32_0 = arith.constant 0 : i32
    %c0_i32_1 = arith.constant 0 : i32
    return %c0_i32, %c0_i32_0 : i32, i32
  }
  func.func @transform_2(%arg0: i32) -> (i32, i32) {
    %c0_i32 = arith.constant 0 : i32
    %c0_i32_0 = arith.constant 0 : i32
    %c0_i32_1 = arith.constant 0 : i32
    return %c0_i32, %c0_i32_0 : i32, i32
  }
  func.func @transform_3(%arg0: i32) -> (i32, i32) {
    %c0_i32 = arith.constant 0 : i32
    %c0_i32_0 = arith.constant 0 : i32
    %c0_i32_1 = arith.constant 0 : i32
    return %c0_i32, %c0_i32_0 : i32, i32
  }
  func.func @transform_4(%arg0: i32) -> (i32, i32) {
    %c0_i32 = arith.constant 0 : i32
    %c0_i32_0 = arith.constant 0 : i32
    %c0_i32_1 = arith.constant 0 : i32
    return %c0_i32, %c0_i32_0 : i32, i32
  }
  func.func @transform_5(%arg0: i32) -> (i32, i32) {
    %c0_i32 = arith.constant 0 : i32
    %c0_i32_0 = arith.constant 0 : i32
    return %c0_i32, %arg0 : i32, i32
  }
}

</mosaic_0001>

<llo_original>
// kernel: gasto_predictor.1
$region0: #{gasto_predictor.1}
  #allocation0 [shape = 'u32[]', space=smem, size = 0x4, offset = 0x4, fixed_abs, tag = 'smem constant byte address 0x4 - core index']
  #allocation1 [shape = 'u32[72,128]{1,0:T(1,128)}', space=vmem, size = 0x9000, scoped, tag = 'internal scratch']
  #allocation2 [shape = 'f32[1,1]{1,0:T(1,128)S(1)}', space=vmem, size = 0x200, scoped, tag = 'scoped memory for gasto_predictor.1']
  %s0 = inlined_call_operand.vmem [shape: f32[5,128], index: 0, kind: input, shape index: {}]
  %s1 = inlined_call_operand.vmem [shape: f32[10,5], index: 1, kind: input, shape index: {}]
  %s2 = inlined_call_operand.vmem [shape: f32[10,1], index: 2, kind: input, shape index: {}]
  %s3 = inlined_call_operand.vmem [shape: f32[10,1], index: 3, kind: input, shape index: {}]
  %s4 = inlined_call_operand.<no memory space> [shape: f32[1,1], index: 4, kind: input, shape index: {}]
  %s5 = inlined_call_operand.vmem [shape: f32[1,128], index: 5, kind: output, shape index: {}]
  %s6 = sld [smem:[#allocation0]]
  $region30: #{gasto_predictor.1} parent=0
    _
  %s8 = ssub.s32 1, %s6
  %s9 = scalar_select 0, %s8, %s6
  %v10 = vstv %s4
  %11 = vst [vmem:[#allocation2] sm:$0x1] %v10
  // Predicated region
  $region2: #{gasto_predictor.1} parent=0 // pred_check
    _
  $region3: #{gasto_predictor.1} parent=0 // pred_check_branch
    %13 = sbr.rel (0) target = $region5
  $region4: #{gasto_predictor.1} parent=0 // pred_region
    _
  $region5: #{gasto_predictor.1} parent=0 // pred_fallthru
    _
  // Predicated region
  $region6: #{gasto_predictor.1} parent=0 // pred_check
    _
  $region7: #{gasto_predictor.1} parent=0 // pred_check_branch
    %15 = sbr.rel (0) target = $region9
  $region8: #{gasto_predictor.1} parent=0 // pred_region
    _
  $region9: #{gasto_predictor.1} parent=0 // pred_fallthru
    _
  // Predicated region
  $region10: #{gasto_predictor.1} parent=0 // pred_check
    _
  $region11: #{gasto_predictor.1} parent=0 // pred_check_branch
    %17 = sbr.rel (0) target = $region13
  $region12: #{gasto_predictor.1} parent=0 // pred_region
    _
  $region13: #{gasto_predictor.1} parent=0 // pred_fallthru
    _
  // Predicated region
  $region14: #{gasto_predictor.1} parent=0 // pred_check
    _
  $region15: #{gasto_predictor.1} parent=0 // pred_check_branch
    %19 = sbr.rel (0) target = $region17
  $region16: #{gasto_predictor.1} parent=0 // pred_region
    _
  $region17: #{gasto_predictor.1} parent=0 // pred_fallthru
    _
  // Predicated region
  $region18: #{gasto_predictor.1} parent=0 // pred_check
    _
  $region19: #{gasto_predictor.1} parent=0 // pred_check_branch
    %21 = sbr.rel (0) target = $region21
  $region20: #{gasto_predictor.1} parent=0 // pred_region
    _
  $region21: #{gasto_predictor.1} parent=0 // pred_fallthru
    _
  %v22 = vld [vmem:[%s0] sm:$0x1f]
  %v23 = vld [vmem:[%s1] sm:$0xff]
  %v24 = vld [vmem:[%s1 + $0x8] sm:$0x3]
  %v25 = vld [vmem:[%s2] sm:$0xff]
  %v26 = vld [vmem:[%s2 + $0x8] sm:$0x3]
  %28 = vset.pattern.permute.xlu0 0
  %29 = vperm.xlu0 %28, %v25
  %v30 = vpop.permute.xlu0 %29
  %33 = vset.pattern.permute.xlu0 0
  %34 = vperm.xlu0 %33, %v26
  %v35 = vpop.permute.xlu0 %34
  %vm37 = vcmask 39936
  %v39 = vsel %vm37, %v23, 0
  %v42 = vsel %vm37, %v24, 0
  %vm44 = vcmask 1044480
  %v46 = vsel %vm44, %v22, 0
  %48 = vmatpush.msra.mxu0 0.0
  %49 = vmatpush.msra.mxu0 0.0
  %50 = vmatpush.msra.mxu0 0.0
  %51 = vmatpush.msra.mxu0 0.0
  %52 = vmatpush.msra.mxu0 0.0
  %53 = vmatpush.msra.mxu0 0.0
  %54 = vmatpush.msra.mxu0 0.0
  %55 = vmatpush.msra.mxu0 0.0
  %56 = vmatpush.msra.mxu0 0.0
  %57 = vmatpush.msra.mxu0 0.0
  %58 = vmatpush.msra.mxu0 0.0
  %59 = vmatpush.msra.mxu0 0.0
  %60 = vmatpush.msra.mxu0 0.0
  %61 = vmatpush.msra.mxu0 0.0
  %62 = vmatpush.msra.mxu0 0.0
  %63 = vmatpush.msra.mxu0 %v46
  %64 = vmatmul.f32.gmra.mxu0 %v39
  %v65 = vpop.f32.mrf.mxu0
  %v66 = vadd.f32 %v30, %v65
  %67 = vmatmul.f32.gmra.mxu0 %v42
  %v68 = vpop.f32.mrf.mxu0
  %v69 = vadd.f32 %v35, %v68
  %70 = vdwg.mxu0
  %v71 = vmax.f32 %v66, 0.0
  %v72 = vmax.f32 %v69, 0.0
  %v73 = vld [vmem:[%s3] sm:$0xff]
  %v74 = vld [vmem:[%s3 + $0x8] sm:$0x3]
  %76 = vset.pattern.permute.xlu0 0
  %77 = vperm.xlu0 %76, %v73
  %v78 = vpop.permute.xlu0 %77
  %81 = vset.pattern.permute.xlu0 0
  %82 = vperm.xlu0 %81, %v74
  %v83 = vpop.permute.xlu0 %82
  %v85 = vmul.f32 %v71, %v78
  %v86 = vmul.f32 %v72, %v83
  %vm87 = vcmask 1041408
  %v88 = vsel %vm87, %v86, 0.0
  %v89 = vadd.f32 %v85, %v88
  %v90 = vrot.slane %v89, 4
  %v91 = vadd.f32 %v89, %v90
  %v92 = vrot.slane %v91, 2
  %v93 = vadd.f32 %v91, %v92
  %v94 = vrot.slane %v93, 1
  %v95 = vadd.f32 %v93, %v94
  %v96 = vld [vmem:[#allocation2] sm:$0x1]
  %98 = vset.pattern.permute.xlu0 0
  %99 = vperm.xlu0 %98, %v96
  %v100 = vpop.permute.xlu0 %99
  %v102 = vperm.slane %v100, 0
  %v103 = vadd.f32 %v95, %v102
  %104 = vst [vmem:[%s5] sm:$0x1] %v103
  // Predicated region
  $region22: #{gasto_predictor.1} parent=0 // pred_check
    _
  $region23: #{gasto_predictor.1} parent=0 // pred_check_branch
    %106 = sbr.rel (0) target = $region25
  $region24: #{gasto_predictor.1} parent=0 // pred_region
    _
  $region25: #{gasto_predictor.1} parent=0 // pred_fallthru
    _
  // Predicated region
  $region26: #{gasto_predictor.1} parent=0 // pred_check
    _
  $region27: #{gasto_predictor.1} parent=0 // pred_check_branch
    %108 = sbr.rel (0) target = $region29
  $region28: #{gasto_predictor.1} parent=0 // pred_region
    _
  $region29: #{gasto_predictor.1} parent=0 // pred_fallthru
    _

</llo_original>
